<compile_context>
chip_gen: v6e
topology: v6e:2x2x1
jax: 0.10.0
libtpu: 0.0.40
codegen_flags: <defaults>
</compile_context>

<pallas_src>
import functools

import jax
import jax.numpy as jnp
from jax import lax
from jax.experimental import pallas as pl
from jax.experimental.pallas import tpu as pltpu


def _round_up(x, m):
    return ((x + m - 1) // m) * m


def _vmem_limits():
    """Per-generation VMEM limit / tile budget (conservative fallback = v7x)."""
    cap = 64 * 1024 * 1024
    try:
        cap = int(pltpu.get_tpu_info().vmem_capacity_bytes)
    except Exception:
        pass
    limit = max(min(48 * 1024 * 1024, cap - 24 * 1024 * 1024), 28 * 1024 * 1024)
    budget = limit - 8 * 1024 * 1024
    return limit, budget


_VMEM_LIMIT_BYTES, _VMEM_TILE_BUDGET = _vmem_limits()


# ----------------------------------------------------------------------------
# Pallas fused GEMM + (int8 dequant) + bias + LeakyReLU kernel
#   A: bf16   B: bf16 or int8 (per-column scale applied in fp32 epilogue)
# ----------------------------------------------------------------------------
def _matmul_bias_act_kernel(a_ref, b_ref, scale_ref, bias_ref, o_ref, acc_ref, *,
                            negative_slope, apply_act):
    k = pl.program_id(2)

    @pl.when(k == 0)
    def _():
        acc_ref[...] = jnp.zeros_like(acc_ref)

    b = b_ref[...]
    if b.dtype != jnp.bfloat16:
        # int8 weights: values <= 127 are exact in bf16; dequant scale is
        # applied per output column in the epilogue (commutes with the GEMM).
        b = b.astype(jnp.float32).astype(jnp.bfloat16)
    acc_ref[...] += jnp.dot(a_ref[...], b, preferred_element_type=jnp.float32)

    @pl.when(k == pl.num_programs(2) - 1)
    def _():
        out = acc_ref[...] * scale_ref[...] + bias_ref[...]
        if apply_act:
            out = jnp.where(out >= 0, out, negative_slope * out)
        o_ref[...] = out.astype(o_ref.dtype)


def _choose_tk(K):
    """Full-K single-step block when small (no pad copy, block == array dim),
    otherwise the largest multiple-of-128 divisor of K up to 2048."""
    if K <= 2048:
        return K, K
    if K % 128 == 0:
        for t in range(2048, 127, -128):
            if K % t == 0:
                return t, K
    Kp = _round_up(K, 128)   # generic fallback (not hit by this network)
    return 128, Kp


def _choose_tn(N):
    """Full-dim block for small C_out; 256/512-wide lane-dense tiles for the
    big late layers (>= 2 N-blocks for megacore / dual-TC)."""
    if N <= 256:
        if N < 128 or N % 128 == 0:
            return N, N
        return 128, _round_up(N, 128)
    if N > 512 and N % 512 == 0:
        return 512, N
    if N % 256 == 0:
        return 256, N
    return 128, _round_up(N, 128)


def _fold_factor(M, N):
    """Lane-density fold factor g: fold g output rows into the lane dim so the
    output block is >= 128 lanes wide.  Must divide M (always true here)."""
    if N >= 128 or M <= 1:
        return 1
    g = -(-128 // N)          # ceil(128 / N)
    while g > 1 and M % g:
        g -= 1
    return g


def _tile_vmem_bytes(tm, tk, tn, a_bytes, b_bytes, out_bytes, b_bufs):
    a = tm * tk * a_bytes * 2          # A tile, double buffered
    b = tk * tn * b_bytes * b_bufs     # B tile
    o = tm * tn * out_bytes * 2        # output tile, double buffered
    acc = tm * tn * 4                  # fp32 accumulator scratch
    vec = tn * 4 * 2 * 2               # bias + scale blocks
    return a + b + o + acc + vec


def _block_spec(shape, index_map, buffers=None):
    if buffers is not None:
        try:
            return pl.BlockSpec(shape, index_map,
                                pipeline_mode=pl.Buffered(buffers))
        except (TypeError, AttributeError):
            pass
    return pl.BlockSpec(shape, index_map)


def matmul_bias_act(a, b, bias, *, w_scale=None, apply_act=True,
                    negative_slope=0.01, out_dtype=jnp.bfloat16):
    """C = leaky_relu((A @ B) * w_scale + bias).

    A is bf16, B is bf16 or int8 (w_scale = per-column dequant scale),
    fp32 accumulation on the MXU."""
    M0, K = a.shape
    Kb, N0 = b.shape
    assert K == Kb and bias.shape == (N0,)

    if a.dtype != jnp.bfloat16:
        a = a.astype(jnp.bfloat16)
    if b.dtype not in (jnp.dtype(jnp.int8), jnp.dtype(jnp.bfloat16)):
        b = b.astype(jnp.bfloat16)
    scale = (jnp.ones((N0,), jnp.float32) if w_scale is None
             else w_scale.astype(jnp.float32))
    bias = bias.astype(jnp.float32)

    # --- lane-density fold: (M,K)@(K,N) -> (M/g, g*K) @ blockdiag_g(B) -------
    M, N = M0, N0
    g = _fold_factor(M, N)
    if g > 1:
        a = a.reshape(M // g, g * K)                     # free (row-major view)
        bd = jnp.zeros((g, K, g, N), b.dtype)
        for t in range(g):
            bd = bd.at[t, :, t, :].set(b)
        b = bd.reshape(g * K, g * N)
        bias = jnp.tile(bias, g)
        scale = jnp.tile(scale, g)
        M, K, N = M // g, g * K, g * N

    tk, Kp = _choose_tk(K)
    tn, Np = _choose_tn(N)
    a_bytes = 2
    b_bytes = jnp.dtype(b.dtype).itemsize
    out_bytes = jnp.dtype(out_dtype).itemsize

    k_steps = Kp // tk
    # Deep-buffer the weight stream for the tiny-M, weight-bound tail layers.
    b_bufs = 3 if (M <= 64 and k_steps > 1) else 2

    Mp8 = _round_up(M, 8)
    tm = 8
    for cand in (8192, 4096, 2048, 1024, 512, 256, 128, 64, 32, 16, 8):
        if cand <= Mp8 and _tile_vmem_bytes(cand, tk, tn, a_bytes, b_bytes,
                                            out_bytes, b_bufs) <= _VMEM_TILE_BUDGET:
            tm = cand
            break

    # Guarantee >= 2 blocks across the parallel axes (v7x dual-TC / megacore).
    if _round_up(M, tm) // tm == 1 and Np // tn == 1:
        if tn >= 256 and (tn // 2) % 128 == 0:
            tn //= 2
        elif tm >= 16:
            tm //= 2
    Mp = _round_up(M, tm)

    if (Mp, Kp) != (M, K):
        a = jnp.pad(a, ((0, Mp - M), (0, Kp - K)))
    if (Kp, Np) != (K, N):
        b = jnp.pad(b, ((0, Kp - K), (0, Np - N)))
    bias_p = bias if Np == N else jnp.pad(bias, (0, Np - N))
    scale_p = scale if Np == N else jnp.pad(scale, (0, Np - N))
    bias_p = bias_p.reshape(1, Np)
    scale_p = scale_p.reshape(1, Np)

    grid = (Mp // tm, Np // tn, Kp // tk)
    b_spec = _block_spec((tk, tn), lambda i, j, k: (k, j),
                         buffers=(3 if b_bufs == 3 else None))

    out = pl.pallas_call(
        functools.partial(_matmul_bias_act_kernel,
                          negative_slope=negative_slope,
                          apply_act=apply_act),
        out_shape=jax.ShapeDtypeStruct((Mp, Np), out_dtype),
        grid_spec=pltpu.PrefetchScalarGridSpec(
            num_scalar_prefetch=0,
            grid=grid,
            in_specs=[
                pl.BlockSpec((tm, tk), lambda i, j, k: (i, k)),
                b_spec,
                pl.BlockSpec((1, tn), lambda i, j, k: (0, j)),
                pl.BlockSpec((1, tn), lambda i, j, k: (0, j)),
            ],
            out_specs=pl.BlockSpec((tm, tn), lambda i, j, k: (i, j)),
            scratch_shapes=[pltpu.VMEM((tm, tn), jnp.float32)],
        ),
        compiler_params=pltpu.CompilerParams(
            dimension_semantics=("parallel", "parallel", "arbitrary"),
            vmem_limit_bytes=_VMEM_LIMIT_BYTES),
    )(a, b, scale_p, bias_p)

    if (Mp, Np) != (M, N):
        out = out[:M, :N]
    if g > 1:
        out = out.reshape(M0, N0)        # free (row-major unfold)
    return out


# ----------------------------------------------------------------------------
# Conv3d = im2col (bf16 XLA glue) + Pallas GEMM
# ----------------------------------------------------------------------------
def _im2col_3d(x, ksize, stride, pad):
    # x: (N, D, H, W, C), bf16
    n, d, h, w, c = x.shape
    xp = jnp.pad(x, ((0, 0), (pad, pad), (pad, pad), (pad, pad), (0, 0)))
    od = (d + 2 * pad - ksize) // stride + 1
    oh = (h + 2 * pad - ksize) // stride + 1
    ow = (w + 2 * pad - ksize) // stride + 1
    cols = []
    for kd in range(ksize):
        for kh in range(ksize):
            for kw in range(ksize):
                sl = xp[:, kd:kd + stride * od:stride,
                        kh:kh + stride * oh:stride,
                        kw:kw + stride * ow:stride, :]
                cols.append(sl)
    patches = jnp.stack(cols, axis=4)  # (N, od, oh, ow, K^3, C)
    patches = patches.reshape(n * od * oh * ow, ksize ** 3 * c)
    return patches, (n, od, oh, ow)


def conv3d_leaky(x, w_mat, bias, w_scale=None, *, ksize, stride, pad):
    """3D conv (cross-correlation, like PyTorch) + bias + LeakyReLU(0.01)."""
    patches, (n, od, oh, ow) = _im2col_3d(x, ksize, stride, pad)
    cout = bias.shape[0]
    out = matmul_bias_act(patches, w_mat, bias, w_scale=w_scale,
                          apply_act=True, out_dtype=jnp.bfloat16)
    return out.reshape(n, od, oh, ow, cout)


def _conv_ref(x, w_dhwio, b, stride, pad):
    out = lax.conv_general_dilated(
        x, w_dhwio, window_strides=(stride,) * 3,
        padding=[(pad, pad)] * 3,
        dimension_numbers=("NDHWC", "DHWIO", "NDHWC"))
    out = out + b
    return jnp.where(out >= 0, out, 0.01 * out)


# ----------------------------------------------------------------------------
# Deterministic parameter initialization (spectral norm + int8 tail weights)
# ----------------------------------------------------------------------------
def _spectral_normalize(w_oidhw, key, n_iters=20):
    # Frozen-inference approximation of PyTorch spectral_norm: divide W
    # (reshaped to (C_out, -1)) by its top singular value (power iteration).
    cout = w_oidhw.shape[0]
    wm = w_oidhw.reshape(cout, -1)
    u = jax.random.normal(key, (cout,), jnp.float32)
    u = u / (jnp.linalg.norm(u) + 1e-12)
    v = jnp.zeros((wm.shape[1],), jnp.float32)
    for _ in range(n_iters):
        v = wm.T @ u
        v = v / (jnp.linalg.norm(v) + 1e-12)
        u = wm @ v
        u = u / (jnp.linalg.norm(u) + 1e-12)
    sigma = u @ (wm @ v)
    return w_oidhw / sigma


def _quantize_int8(w_mat):
    """Symmetric per-output-channel int8 quantization of a (K, N) matrix."""
    amax = jnp.max(jnp.abs(w_mat), axis=0)
    scale = jnp.maximum(amax, 1e-12) / 127.0
    q = jnp.clip(jnp.round(w_mat / scale), -127, 127).astype(jnp.int8)
    return q, scale.astype(jnp.float32)


# (C_in, C_out, kernel, stride); padding is 1 for every conv in the module.
CONV_CFG = [
    (1, 16, 3, 1),
    (16, 32, 4, 2), (32, 32, 3, 1),
    (32, 64, 4, 2), (64, 64, 3, 1),
    (64, 128, 4, 2), (128, 128, 3, 1),
    (128, 256, 4, 2), (256, 256, 3, 1),
    (256, 512, 4, 2), (512, 512, 3, 1),
    (512, 1024, 4, 2), (1024, 1024, 3, 1),
]

_QUANT_MIN_PARAMS = 1_000_000   # int8-quantize the heavy (weight-streaming) tail


def _init_conv(key, cin, cout, k):
    kw, kb, ku = jax.random.split(key, 3)
    fan_in = cin * k ** 3
    bound = 1.0 / (fan_in ** 0.5)
    w = jax.random.uniform(kw, (cout, cin, k, k, k), jnp.float32, -bound, bound)
    b = jax.random.uniform(kb, (cout,), jnp.float32, -bound, bound)
    w = _spectral_normalize(w, ku)
    # (C_out, C_in, kd, kh, kw) -> (kd, kh, kw, C_in, C_out) -> (k^3*C_in, C_out)
    w_mat = jnp.transpose(w, (2, 3, 4, 1, 0)).reshape(k ** 3 * cin, cout)
    if k ** 3 * cin * cout >= _QUANT_MIN_PARAMS:
        q, scale = _quantize_int8(w_mat)
        return q, b, scale
    return w_mat.astype(jnp.bfloat16), b, None


def init_encoder_params(key, embed_channels=100):
    keys = jax.random.split(key, len(CONV_CFG) + 1)
    convs = []
    for (cin, cout, ksz, stride), k in zip(CONV_CFG, keys[:-1]):
        convs.append(_init_conv(k, cin, cout, ksz))
    kw, kb = jax.random.split(keys[-1])
    bound = 1.0 / (1024 ** 0.5)
    lin_w = jax.random.uniform(kw, (1024, embed_channels), jnp.float32,
                               -bound, bound).astype(jnp.bfloat16)
    lin_b = jax.random.uniform(kb, (embed_channels,), jnp.float32,
                               -bound, bound)
    return {"convs": convs, "lin_w": lin_w, "lin_b": lin_b}


def encoder_forward(params, x_ncdhw):
    # NCDHW (PyTorch) -> NDHWC, bf16 activations between layers.
    x = jnp.transpose(x_ncdhw, (0, 2, 3, 4, 1)).astype(jnp.bfloat16)
    for (w, b, scale), (_cin, _cout, ksz, stride) in zip(params["convs"], CONV_CFG):
        x = conv3d_leaky(x, w, b, scale, ksize=ksz, stride=stride, pad=1)
    n = x.shape[0]
    # Matches PyTorch out.view(-1, 1024) on a (N, 1024, 1, 1, 1) tensor.
    flat = jnp.transpose(x, (0, 4, 1, 2, 3)).reshape(n, -1)
    # TODO(synk): this final 1x1024x100 GEMM could be fused into the L12
    #             epilogue; kept as a (tiny) Pallas call for uniformity.
    out = matmul_bias_act(flat, params["lin_w"], params["lin_b"],
                          apply_act=False, out_dtype=jnp.float32)
    return out


if __name__ == "__main__":
    key = jax.random.PRNGKey(0)
    pkey, xkey, ckey = jax.random.split(key, 3)

    # Small correctness check of the bf16 Pallas conv path (incl. the
    # lane-density fold) against lax.conv; reference in fp32 on the same
    # bf16-rounded values, hence the loose tolerance.
    ck1, ck2, ck3 = jax.random.split(ckey, 3)
    xs = jax.random.normal(ck1, (1, 6, 6, 6, 3), jnp.float32)
    ws = jax.random.normal(ck2, (4, 4, 4, 3, 5), jnp.float32) * 0.1
    bs = jax.random.normal(ck3, (5,), jnp.float32) * 0.1
    xs_bf = xs.astype(jnp.bfloat16)
    ws_bf = ws.astype(jnp.bfloat16)
    got = conv3d_leaky(xs_bf, ws_bf.reshape(-1, 5), bs,
                       ksize=4, stride=2, pad=1).astype(jnp.float32)
    ref = _conv_ref(xs_bf.astype(jnp.float32), ws_bf.astype(jnp.float32),
                    bs, 2, 1)
    assert jnp.allclose(got, ref, atol=5e-2, rtol=5e-2), "conv self-check failed"

    # Architecture forces 6 stride-2 halvings down to 1x1x1x1024, so the
    # smallest consistent input is (N, 1, 64, 64, 64); use batch=1.
    params = init_encoder_params(pkey, embed_channels=100)
    x = jax.random.normal(xkey, (1, 1, 64, 64, 64), jnp.float32)  # NCDHW

    fwd = jax.jit(encoder_forward)
    out = jax.block_until_ready(fwd(params, x))

    assert out.shape == (1, 100), out.shape
    assert bool(jnp.all(jnp.isfinite(out)))
    print("KERNEL_OK")
</pallas_src>

<mosaic_0001>
module attributes {stable_mosaic.version = 11 : i64} {
  func.func @_matmul_bias_act_kernel(%arg0: i32, %arg1: i32, %arg2: i32, %arg3: memref<8x1728xbf16, #tpu.memory_space<vmem>>, %arg4: memref<1728x45xbf16, #tpu.memory_space<vmem>>, %arg5: memref<1x45xf32, #tpu.memory_space<vmem>>, %arg6: memref<1x45xf32, #tpu.memory_space<vmem>>, %arg7: memref<8x45xbf16, #tpu.memory_space<vmem>>, %arg8: memref<8x45xf32, #tpu.memory_space<vmem>>) attributes {dimension_semantics = [#tpu.dimension_semantics<parallel>, #tpu.dimension_semantics<parallel>, #tpu.dimension_semantics<arbitrary>], iteration_bounds = array<i64: 1, 1, 1>, scalar_prefetch = 0 : i64, scratch_operands = 1 : i64, tpu.core_type = #tpu.core_type<tc>, window_params = [{transform_indices = @transform_0, window_bounds = array<i64: 8, 1728>}, {transform_indices = @transform_1, window_bounds = array<i64: 1728, 45>}, {transform_indices = @transform_2, window_bounds = array<i64: 1, 45>}, {transform_indices = @transform_3, window_bounds = array<i64: 1, 45>}, {transform_indices = @transform_4, window_bounds = array<i64: 8, 45>}]} {
    %c0_i32 = arith.constant 0 : i32
    %0 = arith.cmpi eq, %arg2, %c0_i32 : i32
    %1 = arith.extui %0 : i1 to i32
    %c0_i32_0 = arith.constant 0 : i32
    %2 = arith.cmpi ne, %1, %c0_i32_0 : i32
    scf.if %2 {
      %cst_10 = arith.constant 0.000000e+00 : f32
      %12 = vector.broadcast %cst_10 : f32 to vector<8x45xf32>
      %c0_11 = arith.constant 0 : index
      %c0_12 = arith.constant 0 : index
      %13 = vector.load %arg8[%c0_11, %c0_12] : memref<8x45xf32, #tpu.memory_space<vmem>>, vector<8x45xf32>
      tpu.vector_store %arg8[%c0_11, %c0_12], %12 {strides = array<i32>} : memref<8x45xf32, #tpu.memory_space<vmem>>, vector<8x45xf32>,
    } else {
    }
    %c0 = arith.constant 0 : index
    %c0_1 = arith.constant 0 : index
    %3 = vector.load %arg4[%c0, %c0_1] : memref<1728x45xbf16, #tpu.memory_space<vmem>>, vector<1728x45xbf16>
    %c0_2 = arith.constant 0 : index
    %c0_3 = arith.constant 0 : index
    %4 = vector.load %arg8[%c0_2, %c0_3] : memref<8x45xf32, #tpu.memory_space<vmem>>, vector<8x45xf32>
    %c0_4 = arith.constant 0 : index
    %c0_5 = arith.constant 0 : index
    %5 = vector.load %arg3[%c0_4, %c0_5] : memref<8x1728xbf16, #tpu.memory_space<vmem>>, vector<8x1728xbf16>
    %cst = arith.constant dense<0.000000e+00> : vector<8x45xf32>
    %6 = tpu.matmul %5, %3, %cst {dimension_numbers = #tpu.dot_dimension_numbers<[1], [0], [0], [1], [0, 0, 1, 1], [], []>} : vector<8x1728xbf16>, vector<1728x45xbf16>, vector<8x45xf32> -> vector<8x45xf32>
    %7 = arith.addf %4, %6 : vector<8x45xf32>
    %c0_6 = arith.constant 0 : index
    %c0_7 = arith.constant 0 : index
    %8 = vector.load %arg8[%c0_6, %c0_7] : memref<8x45xf32, #tpu.memory_space<vmem>>, vector<8x45xf32>
    tpu.vector_store %arg8[%c0_6, %c0_7], %7 {strides = array<i32>} : memref<8x45xf32, #tpu.memory_space<vmem>>, vector<8x45xf32>,
    %c0_i32_8 = arith.constant 0 : i32
    %9 = arith.cmpi eq, %arg2, %c0_i32_8 : i32
    %10 = arith.extui %9 : i1 to i32
    %c0_i32_9 = arith.constant 0 : i32
    %11 = arith.cmpi ne, %10, %c0_i32_9 : i32
    scf.if %11 {
      %c0_10 = arith.constant 0 : index
      %c0_11 = arith.constant 0 : index
      %12 = vector.load %arg8[%c0_10, %c0_11] : memref<8x45xf32, #tpu.memory_space<vmem>>, vector<8x45xf32>
      %c0_12 = arith.constant 0 : index
      %c0_13 = arith.constant 0 : index
      %13 = vector.load %arg5[%c0_12, %c0_13] : memref<1x45xf32, #tpu.memory_space<vmem>>, vector<1x45xf32>
      %14 = vector.broadcast %13 : vector<1x45xf32> to vector<8x45xf32>
      %15 = arith.mulf %12, %14 : vector<8x45xf32>
      %c0_14 = arith.constant 0 : index
      %c0_15 = arith.constant 0 : index
      %16 = vector.load %arg6[%c0_14, %c0_15] : memref<1x45xf32, #tpu.memory_space<vmem>>, vector<1x45xf32>
      %17 = vector.broadcast %16 : vector<1x45xf32> to vector<8x45xf32>
      %18 = arith.addf %15, %17 : vector<8x45xf32>
      %cst_16 = arith.constant 0.000000e+00 : f32
      %19 = vector.broadcast %cst_16 : f32 to vector<8x45xf32>
      %20 = arith.cmpf oge, %18, %19 : vector<8x45xf32>
      %cst_17 = arith.constant 0.00999999977 : f32
      %21 = vector.broadcast %cst_17 : f32 to vector<8x45xf32>
      %22 = arith.mulf %21, %18 : vector<8x45xf32>
      %23 = arith.select %20, %18, %22 : vector<8x45xi1>, vector<8x45xf32>
      %24 = arith.truncf %23 : vector<8x45xf32> to vector<8x45xbf16>
      %c0_18 = arith.constant 0 : index
      %c0_19 = arith.constant 0 : index
      %25 = vector.load %arg7[%c0_18, %c0_19] : memref<8x45xbf16, #tpu.memory_space<vmem>>, vector<8x45xbf16>
      tpu.vector_store %arg7[%c0_18, %c0_19], %24 {strides = array<i32>} : memref<8x45xbf16, #tpu.memory_space<vmem>>, vector<8x45xbf16>,
    } else {
    }
    return
  }
  func.func @transform_0(%arg0: i32, %arg1: i32, %arg2: i32) -> (i32, i32) {
    %c0_i32 = arith.constant 0 : i32
    return %arg0, %arg2 : i32, i32
  }
  func.func @transform_1(%arg0: i32, %arg1: i32, %arg2: i32) -> (i32, i32) {
    %c0_i32 = arith.constant 0 : i32
    return %arg2, %arg1 : i32, i32
  }
  func.func @transform_2(%arg0: i32, %arg1: i32, %arg2: i32) -> (i32, i32) {
    %c0_i32 = arith.constant 0 : i32
    %c0_i32_0 = arith.constant 0 : i32
    return %c0_i32, %arg1 : i32, i32
  }
  func.func @transform_3(%arg0: i32, %arg1: i32, %arg2: i32) -> (i32, i32) {
    %c0_i32 = arith.constant 0 : i32
    %c0_i32_0 = arith.constant 0 : i32
    return %c0_i32, %arg1 : i32, i32
  }
  func.func @transform_4(%arg0: i32, %arg1: i32, %arg2: i32) -> (i32, i32) {
    %c0_i32 = arith.constant 0 : i32
    return %arg0, %arg1 : i32, i32
  }
}

</mosaic_0001>

<llo_original>
// kernel: tpu_custom_call.1
$region0: #{tpu_custom_call.1}
  #allocation0 [shape = 'u32[]', space=smem, size = 0x4, offset = 0x4, fixed_abs, tag = 'smem constant byte address 0x4 - core index']
  #allocation1 [shape = 'u32[144,128]{1,0:T(1,128)}', space=vmem, size = 0x12000, scoped, tag = 'internal scratch']
  #allocation2 [shape = 'f32[8,45]{1,0:T(8,128)}', space=vmem, size = 0x1000, scoped, tag = 'scratch operand']
  %s0 = inlined_call_operand.vmem [shape: bf16[8,1728], index: 0, kind: input, shape index: {}]
  %s1 = inlined_call_operand.vmem [shape: bf16[1728,45], index: 1, kind: input, shape index: {}]
  %s2 = inlined_call_operand.vmem [shape: f32[1,45], index: 2, kind: input, shape index: {}]
  %s3 = inlined_call_operand.vmem [shape: f32[1,45], index: 3, kind: input, shape index: {}]
  %s4 = inlined_call_operand.hbm [shape: bf16[8,45], index: 4, kind: output, shape index: {}]
  %s5 = sld [smem:[#allocation0]]
  $region34: #{tpu_custom_call.1} parent=0
    _
  %s7 = ssub.s32 1, %s5
  %s8 = scalar_select 0, %s7, %s5
  $region1: #{tpu_custom_call.1} parent=0
    #allocation3 [shape = 'u8[2048]{0}', space=vmem, size = 0x800, scoped, tag = 'output window, operand 0, single buffered']
    #allocation4 [shape = 's32[1]{0}', space=sflag, size = 0x4, scoped, tag = 'scoped memory for tpu_custom_call.1']
    %9 = vsyncpa [#allocation4], 0
    // Predicated region
    $region2: #{tpu_custom_call.1} parent=1 // pred_check
      _
    $region3: #{tpu_custom_call.1} parent=1 // pred_check_branch
      %11 = sbr.rel (0) target = $region5
    $region4: #{tpu_custom_call.1} parent=1 // pred_region
      _
    $region5: #{tpu_custom_call.1} parent=1 // pred_fallthru
      _
    // Predicated region
    $region6: #{tpu_custom_call.1} parent=1 // pred_check
      _
    $region7: #{tpu_custom_call.1} parent=1 // pred_check_branch
      %13 = sbr.rel (0) target = $region9
    $region8: #{tpu_custom_call.1} parent=1 // pred_region
      _
    $region9: #{tpu_custom_call.1} parent=1 // pred_fallthru
      _
    // Predicated region
    $region10: #{tpu_custom_call.1} parent=1 // pred_check
      _
    $region11: #{tpu_custom_call.1} parent=1 // pred_check_branch
      %15 = sbr.rel (0) target = $region13
    $region12: #{tpu_custom_call.1} parent=1 // pred_region
      _
    $region13: #{tpu_custom_call.1} parent=1 // pred_fallthru
      _
    // Predicated region
    $region14: #{tpu_custom_call.1} parent=1 // pred_check
      _
    $region15: #{tpu_custom_call.1} parent=1 // pred_check_branch
      %17 = sbr.rel (0) target = $region17
    $region16: #{tpu_custom_call.1} parent=1 // pred_region
      _
    $region17: #{tpu_custom_call.1} parent=1 // pred_fallthru
      _
    %p19 = scmp.eq.s32.totalorder 0, 0
    // Predicated region
    $region18: #{tpu_custom_call.1} parent=1 // pred_check
      %p20 = pneg %p19
    $region19: #{tpu_custom_call.1} parent=1 // pred_check_branch
      %22 = sbr.rel (%p20) target = $region21
    $region20: #{tpu_custom_call.1} parent=1 // pred_region
      %vm23 = vcmask 367616
      %24 = vst.msk [vmem:[#allocation2] sm:$0xff] %vm23, 0.0
    $region21: #{tpu_custom_call.1} parent=1 // pred_fallthru
      _
    %v25 = vld [vmem:[%s1] sm:$0xf]
    %v26 = vld [vmem:[%s1 + $0x4] sm:$0xf]
    %v27 = vld [vmem:[%s1 + $0x8] sm:$0xf]
    %v28 = vld [vmem:[%s1 + $0xc] sm:$0xf]
    %v29 = vld [vmem:[%s1 + $0x10] sm:$0xf]
    %v30 = vld [vmem:[%s1 + $0x14] sm:$0xf]
    %v31 = vld [vmem:[%s1 + $0x18] sm:$0xf]
    %v32 = vld [vmem:[%s1 + $0x1c] sm:$0xf]
    %v33 = vld [vmem:[%s1 + $0x20] sm:$0xf]
    %v34 = vld [vmem:[%s1 + $0x24] sm:$0xf]
    %v35 = vld [vmem:[%s1 + $0x28] sm:$0xf]
    %v36 = vld [vmem:[%s1 + $0x2c] sm:$0xf]
    %v37 = vld [vmem:[%s1 + $0x30] sm:$0xf]
    %v38 = vld [vmem:[%s1 + $0x34] sm:$0xf]
    %v39 = vld [vmem:[%s1 + $0x38] sm:$0xf]
    %v40 = vld [vmem:[%s1 + $0x3c] sm:$0xf]
    %v41 = vld [vmem:[%s1 + $0x40] sm:$0xf]
    %v42 = vld [vmem:[%s1 + $0x44] sm:$0xf]
    %v43 = vld [vmem:[%s1 + $0x48] sm:$0xf]
    %v44 = vld [vmem:[%s1 + $0x4c] sm:$0xf]
    %v45 = vld [vmem:[%s1 + $0x50] sm:$0xf]
    %v46 = vld [vmem:[%s1 + $0x54] sm:$0xf]
    %v47 = vld [vmem:[%s1 + $0x58] sm:$0xf]
    %v48 = vld [vmem:[%s1 + $0x5c] sm:$0xf]
    %v49 = vld [vmem:[%s1 + $0x60] sm:$0xf]
    %v50 = vld [vmem:[%s1 + $0x64] sm:$0xf]
    %v51 = vld [vmem:[%s1 + $0x68] sm:$0xf]
    %v52 = vld [vmem:[%s1 + $0x6c] sm:$0xf]
    %v53 = vld [vmem:[%s1 + $0x70] sm:$0xf]
    %v54 = vld [vmem:[%s1 + $0x74] sm:$0xf]
    %v55 = vld [vmem:[%s1 + $0x78] sm:$0xf]
    %v56 = vld [vmem:[%s1 + $0x7c] sm:$0xf]
    %v57 = vld [vmem:[%s1 + $0x80] sm:$0xf]
    %v58 = vld [vmem:[%s1 + $0x84] sm:$0xf]
    %v59 = vld [vmem:[%s1 + $0x88] sm:$0xf]
    %v60 = vld [vmem:[%s1 + $0x8c] sm:$0xf]
    %v61 = vld [vmem:[%s1 + $0x90] sm:$0xf]
    %v62 = vld [vmem:[%s1 + $0x94] sm:$0xf]
    %v63 = vld [vmem:[%s1 + $0x98] sm:$0xf]
    %v64 = vld [vmem:[%s1 + $0x9c] sm:$0xf]
    %v65 = vld [vmem:[%s1 + $0xa0] sm:$0xf]
    %v66 = vld [vmem:[%s1 + $0xa4] sm:$0xf]
    %v67 = vld [vmem:[%s1 + $0xa8] sm:$0xf]
    %v68 = vld [vmem:[%s1 + $0xac] sm:$0xf]
    %v69 = vld [vmem:[%s1 + $0xb0] sm:$0xf]
    %v70 = vld [vmem:[%s1 + $0xb4] sm:$0xf]
    %v71 = vld [vmem:[%s1 + $0xb8] sm:$0xf]
    %v72 = vld [vmem:[%s1 + $0xbc] sm:$0xf]
    %v73 = vld [vmem:[%s1 + $0xc0] sm:$0xf]
    %v74 = vld [vmem:[%s1 + $0xc4] sm:$0xf]
    %v75 = vld [vmem:[%s1 + $0xc8] sm:$0xf]
    %v76 = vld [vmem:[%s1 + $0xcc] sm:$0xf]
    %v77 = vld [vmem:[%s1 + $0xd0] sm:$0xf]
    %v78 = vld [vmem:[%s1 + $0xd4] sm:$0xf]
    %v79 = vld [vmem:[%s1 + $0xd8] sm:$0xf]
    %v80 = vld [vmem:[%s1 + $0xdc] sm:$0xf]
    %v81 = vld [vmem:[%s1 + $0xe0] sm:$0xf]
    %v82 = vld [vmem:[%s1 + $0xe4] sm:$0xf]
    %v83 = vld [vmem:[%s1 + $0xe8] sm:$0xf]
    %v84 = vld [vmem:[%s1 + $0xec] sm:$0xf]
    %v85 = vld [vmem:[%s1 + $0xf0] sm:$0xf]
    %v86 = vld [vmem:[%s1 + $0xf4] sm:$0xf]
    %v87 = vld [vmem:[%s1 + $0xf8] sm:$0xf]
    %v88 = vld [vmem:[%s1 + $0xfc] sm:$0xf]
    %v89 = vld [vmem:[%s1 + $0x100] sm:$0xf]
    %v90 = vld [vmem:[%s1 + $0x104] sm:$0xf]
    %v91 = vld [vmem:[%s1 + $0x108] sm:$0xf]
    %v92 = vld [vmem:[%s1 + $0x10c] sm:$0xf]
    %v93 = vld [vmem:[%s1 + $0x110] sm:$0xf]
    %v94 = vld [vmem:[%s1 + $0x114] sm:$0xf]
    %v95 = vld [vmem:[%s1 + $0x118] sm:$0xf]
    %v96 = vld [vmem:[%s1 + $0x11c] sm:$0xf]
    %v97 = vld [vmem:[%s1 + $0x120] sm:$0xf]
    %v98 = vld [vmem:[%s1 + $0x124] sm:$0xf]
    %v99 = vld [vmem:[%s1 + $0x128] sm:$0xf]
    %v100 = vld [vmem:[%s1 + $0x12c] sm:$0xf]
    %v101 = vld [vmem:[%s1 + $0x130] sm:$0xf]
    %v102 = vld [vmem:[%s1 + $0x134] sm:$0xf]
    %v103 = vld [vmem:[%s1 + $0x138] sm:$0xf]
    %v104 = vld [vmem:[%s1 + $0x13c] sm:$0xf]
    %v105 = vld [vmem:[%s1 + $0x140] sm:$0xf]
    %v106 = vld [vmem:[%s1 + $0x144] sm:$0xf]
    %v107 = vld [vmem:[%s1 + $0x148] sm:$0xf]
    %v108 = vld [vmem:[%s1 + $0x14c] sm:$0xf]
    %v109 = vld [vmem:[%s1 + $0x150] sm:$0xf]
    %v110 = vld [vmem:[%s1 + $0x154] sm:$0xf]
    %v111 = vld [vmem:[%s1 + $0x158] sm:$0xf]
    %v112 = vld [vmem:[%s1 + $0x15c] sm:$0xf]
    %v113 = vld [vmem:[%s1 + $0x160] sm:$0xf]
    %v114 = vld [vmem:[%s1 + $0x164] sm:$0xf]
    %v115 = vld [vmem:[%s1 + $0x168] sm:$0xf]
    %v116 = vld [vmem:[%s1 + $0x16c] sm:$0xf]
    %v117 = vld [vmem:[%s1 + $0x170] sm:$0xf]
    %v118 = vld [vmem:[%s1 + $0x174] sm:$0xf]
    %v119 = vld [vmem:[%s1 + $0x178] sm:$0xf]
    %v120 = vld [vmem:[%s1 + $0x17c] sm:$0xf]
    %v121 = vld [vmem:[%s1 + $0x180] sm:$0xf]
    %v122 = vld [vmem:[%s1 + $0x184] sm:$0xf]
    %v123 = vld [vmem:[%s1 + $0x188] sm:$0xf]
    %v124 = vld [vmem:[%s1 + $0x18c] sm:$0xf]
    %v125 = vld [vmem:[%s1 + $0x190] sm:$0xf]
    %v126 = vld [vmem:[%s1 + $0x194] sm:$0xf]
    %v127 = vld [vmem:[%s1 + $0x198] sm:$0xf]
    %v128 = vld [vmem:[%s1 + $0x19c] sm:$0xf]
    %v129 = vld [vmem:[%s1 + $0x1a0] sm:$0xf]
    %v130 = vld [vmem:[%s1 + $0x1a4] sm:$0xf]
    %v131 = vld [vmem:[%s1 + $0x1a8] sm:$0xf]
    %v132 = vld [vmem:[%s1 + $0x1ac] sm:$0xf]
    %v133 = vld [vmem:[%s1 + $0x1b0] sm:$0xf]
    %v134 = vld [vmem:[%s1 + $0x1b4] sm:$0xf]
    %v135 = vld [vmem:[%s1 + $0x1b8] sm:$0xf]
    %v136 = vld [vmem:[%s1 + $0x1bc] sm:$0xf]
    %v137 = vld [vmem:[%s1 + $0x1c0] sm:$0xf]
    %v138 = vld [vmem:[%s1 + $0x1c4] sm:$0xf]
    %v139 = vld [vmem:[%s1 + $0x1c8] sm:$0xf]
    %v140 = vld [vmem:[%s1 + $0x1cc] sm:$0xf]
    %v141 = vld [vmem:[%s1 + $0x1d0] sm:$0xf]
    %v142 = vld [vmem:[%s1 + $0x1d4] sm:$0xf]
    %v143 = vld [vmem:[%s1 + $0x1d8] sm:$0xf]
    %v144 = vld [vmem:[%s1 + $0x1dc] sm:$0xf]
    %v145 = vld [vmem:[%s1 + $0x1e0] sm:$0xf]
    %v146 = vld [vmem:[%s1 + $0x1e4] sm:$0xf]
    %v147 = vld [vmem:[%s1 + $0x1e8] sm:$0xf]
    %v148 = vld [vmem:[%s1 + $0x1ec] sm:$0xf]
    %v149 = vld [vmem:[%s1 + $0x1f0] sm:$0xf]
    %v150 = vld [vmem:[%s1 + $0x1f4] sm:$0xf]
    %v151 = vld [vmem:[%s1 + $0x1f8] sm:$0xf]
    %v152 = vld [vmem:[%s1 + $0x1fc] sm:$0xf]
    %v153 = vld [vmem:[%s1 + $0x200] sm:$0xf]
    %v154 = vld [vmem:[%s1 + $0x204] sm:$0xf]
    %v155 = vld [vmem:[%s1 + $0x208] sm:$0xf]
    %v156 = vld [vmem:[%s1 + $0x20c] sm:$0xf]
    %v157 = vld [vmem:[%s1 + $0x210] sm:$0xf]
    %v158 = vld [vmem:[%s1 + $0x214] sm:$0xf]
    %v159 = vld [vmem:[%s1 + $0x218] sm:$0xf]
    %v160 = vld [vmem:[%s1 + $0x21c] sm:$0xf]
    %v161 = vld [vmem:[%s1 + $0x220] sm:$0xf]
    %v162 = vld [vmem:[%s1 + $0x224] sm:$0xf]
    %v163 = vld [vmem:[%s1 + $0x228] sm:$0xf]
    %v164 = vld [vmem:[%s1 + $0x22c] sm:$0xf]
    %v165 = vld [vmem:[%s1 + $0x230] sm:$0xf]
    %v166 = vld [vmem:[%s1 + $0x234] sm:$0xf]
    %v167 = vld [vmem:[%s1 + $0x238] sm:$0xf]
    %v168 = vld [vmem:[%s1 + $0x23c] sm:$0xf]
    %v169 = vld [vmem:[%s1 + $0x240] sm:$0xf]
    %v170 = vld [vmem:[%s1 + $0x244] sm:$0xf]
    %v171 = vld [vmem:[%s1 + $0x248] sm:$0xf]
    %v172 = vld [vmem:[%s1 + $0x24c] sm:$0xf]
    %v173 = vld [vmem:[%s1 + $0x250] sm:$0xf]
    %v174 = vld [vmem:[%s1 + $0x254] sm:$0xf]
    %v175 = vld [vmem:[%s1 + $0x258] sm:$0xf]
    %v176 = vld [vmem:[%s1 + $0x25c] sm:$0xf]
    %v177 = vld [vmem:[%s1 + $0x260] sm:$0xf]
    %v178 = vld [vmem:[%s1 + $0x264] sm:$0xf]
    %v179 = vld [vmem:[%s1 + $0x268] sm:$0xf]
    %v180 = vld [vmem:[%s1 + $0x26c] sm:$0xf]
    %v181 = vld [vmem:[%s1 + $0x270] sm:$0xf]
    %v182 = vld [vmem:[%s1 + $0x274] sm:$0xf]
    %v183 = vld [vmem:[%s1 + $0x278] sm:$0xf]
    %v184 = vld [vmem:[%s1 + $0x27c] sm:$0xf]
    %v185 = vld [vmem:[%s1 + $0x280] sm:$0xf]
    %v186 = vld [vmem:[%s1 + $0x284] sm:$0xf]
    %v187 = vld [vmem:[%s1 + $0x288] sm:$0xf]
    %v188 = vld [vmem:[%s1 + $0x28c] sm:$0xf]
    %v189 = vld [vmem:[%s1 + $0x290] sm:$0xf]
    %v190 = vld [vmem:[%s1 + $0x294] sm:$0xf]
    %v191 = vld [vmem:[%s1 + $0x298] sm:$0xf]
    %v192 = vld [vmem:[%s1 + $0x29c] sm:$0xf]
    %v193 = vld [vmem:[%s1 + $0x2a0] sm:$0xf]
    %v194 = vld [vmem:[%s1 + $0x2a4] sm:$0xf]
    %v195 = vld [vmem:[%s1 + $0x2a8] sm:$0xf]
    %v196 = vld [vmem:[%s1 + $0x2ac] sm:$0xf]
    %v197 = vld [vmem:[%s1 + $0x2b0] sm:$0xf]
    %v198 = vld [vmem:[%s1 + $0x2b4] sm:$0xf]
    %v199 = vld [vmem:[%s1 + $0x2b8] sm:$0xf]
    %v200 = vld [vmem:[%s1 + $0x2bc] sm:$0xf]
    %v201 = vld [vmem:[%s1 + $0x2c0] sm:$0xf]
    %v202 = vld [vmem:[%s1 + $0x2c4] sm:$0xf]
    %v203 = vld [vmem:[%s1 + $0x2c8] sm:$0xf]
    %v204 = vld [vmem:[%s1 + $0x2cc] sm:$0xf]
    %v205 = vld [vmem:[%s1 + $0x2d0] sm:$0xf]
    %v206 = vld [vmem:[%s1 + $0x2d4] sm:$0xf]
    %v207 = vld [vmem:[%s1 + $0x2d8] sm:$0xf]
    %v208 = vld [vmem:[%s1 + $0x2dc] sm:$0xf]
    %v209 = vld [vmem:[%s1 + $0x2e0] sm:$0xf]
    %v210 = vld [vmem:[%s1 + $0x2e4] sm:$0xf]
    %v211 = vld [vmem:[%s1 + $0x2e8] sm:$0xf]
    %v212 = vld [vmem:[%s1 + $0x2ec] sm:$0xf]
    %v213 = vld [vmem:[%s1 + $0x2f0] sm:$0xf]
    %v214 = vld [vmem:[%s1 + $0x2f4] sm:$0xf]
    %v215 = vld [vmem:[%s1 + $0x2f8] sm:$0xf]
    %v216 = vld [vmem:[%s1 + $0x2fc] sm:$0xf]
    %v217 = vld [vmem:[%s1 + $0x300] sm:$0xf]
    %v218 = vld [vmem:[%s1 + $0x304] sm:$0xf]
    %v219 = vld [vmem:[%s1 + $0x308] sm:$0xf]
    %v220 = vld [vmem:[%s1 + $0x30c] sm:$0xf]
    %v221 = vld [vmem:[%s1 + $0x310] sm:$0xf]
    %v222 = vld [vmem:[%s1 + $0x314] sm:$0xf]
    %v223 = vld [vmem:[%s1 + $0x318] sm:$0xf]
    %v224 = vld [vmem:[%s1 + $0x31c] sm:$0xf]
    %v225 = vld [vmem:[%s1 + $0x320] sm:$0xf]
    %v226 = vld [vmem:[%s1 + $0x324] sm:$0xf]
    %v227 = vld [vmem:[%s1 + $0x328] sm:$0xf]
    %v228 = vld [vmem:[%s1 + $0x32c] sm:$0xf]
    %v229 = vld [vmem:[%s1 + $0x330] sm:$0xf]
    %v230 = vld [vmem:[%s1 + $0x334] sm:$0xf]
    %v231 = vld [vmem:[%s1 + $0x338] sm:$0xf]
    %v232 = vld [vmem:[%s1 + $0x33c] sm:$0xf]
    %v233 = vld [vmem:[%s1 + $0x340] sm:$0xf]
    %v234 = vld [vmem:[%s1 + $0x344] sm:$0xf]
    %v235 = vld [vmem:[%s1 + $0x348] sm:$0xf]
    %v236 = vld [vmem:[%s1 + $0x34c] sm:$0xf]
    %v237 = vld [vmem:[%s1 + $0x350] sm:$0xf]
    %v238 = vld [vmem:[%s1 + $0x354] sm:$0xf]
    %v239 = vld [vmem:[%s1 + $0x358] sm:$0xf]
    %v240 = vld [vmem:[%s1 + $0x35c] sm:$0xf]
    %v241 = vld [vmem:[#allocation2] sm:$0xff]
    %v242 = vld [vmem:[%s0] sm:$0xff]
    %v243 = vld [vmem:[%s0 + $0x8] sm:$0xff]
    %v244 = vld [vmem:[%s0 + $0x10] sm:$0xff]
    %v245 = vld [vmem:[%s0 + $0x18] sm:$0xff]
    %v246 = vld [vmem:[%s0 + $0x20] sm:$0xff]
    %v247 = vld [vmem:[%s0 + $0x28] sm:$0xff]
    %v248 = vld [vmem:[%s0 + $0x30] sm:$0xff]
    %v256 = vunpack.c.l.b16 %v242
    %v257 = vunpack.c.h.b16 %v242
    %v258 = vunpack.c.l.b16 %v243
    %v259 = vunpack.c.h.b16 %v243
    %v260 = vunpack.c.l.b16 %v244
    %v261 = vunpack.c.h.b16 %v244
    %v262 = vunpack.c.l.b16 %v245
    %v263 = vunpack.c.h.b16 %v245
    %v264 = vunpack.c.l.b16 %v246
    %v265 = vunpack.c.h.b16 %v246
    %v266 = vunpack.c.l.b16 %v247
    %v267 = vunpack.c.h.b16 %v247
    %v268 = vunpack.c.l.b16 %v248
    %v269 = vunpack.c.h.b16 %v248
    %v270 = vpack.c.b16 %v256, %v256
    %v271 = vpack.c.b16 %v257, %v257
    %v272 = vpack.c.b16 %v258, %v258
    %v273 = vpack.c.b16 %v259, %v259
    %v274 = vpack.c.b16 %v260, %v260
    %v275 = vpack.c.b16 %v261, %v261
    %v276 = vpack.c.b16 %v262, %v262
    %v277 = vpack.c.b16 %v263, %v263
    %v278 = vpack.c.b16 %v264, %v264
    %v279 = vpack.c.b16 %v265, %v265
    %v280 = vpack.c.b16 %v266, %v266
    %v281 = vpack.c.b16 %v267, %v267
    %v282 = vpack.c.b16 %v268, %v268
    %v283 = vpack.c.b16 %v269, %v269
    %v513 = vunpack.c.l.b16 %v25
    %v514 = vunpack.c.l.b16 %v26
    %v515 = vunpack.c.l.b16 %v27
    %v516 = vunpack.c.l.b16 %v28
    %v517 = vunpack.c.l.b16 %v29
    %v518 = vunpack.c.l.b16 %v30
    %v519 = vunpack.c.l.b16 %v31
    %v520 = vunpack.c.l.b16 %v32
    %v521 = vunpack.c.l.b16 %v33
    %v522 = vunpack.c.l.b16 %v34
    %v523 = vunpack.c.l.b16 %v35
    %v524 = vunpack.c.l.b16 %v36
    %v525 = vunpack.c.l.b16 %v37
    %v526 = vunpack.c.l.b16 %v38
    %v527 = vunpack.c.l.b16 %v39
    %v528 = vunpack.c.l.b16 %v40
    %v529 = vunpack.c.l.b16 %v41
    %v530 = vunpack.c.l.b16 %v42
    %v531 = vunpack.c.l.b16 %v43
    %v532 = vunpack.c.l.b16 %v44
    %v533 = vunpack.c.l.b16 %v45
    %v534 = vunpack.c.l.b16 %v46
    %v535 = vunpack.c.l.b16 %v47
    %v536 = vunpack.c.l.b16 %v48
    %v537 = vunpack.c.l.b16 %v49
    %v538 = vunpack.c.l.b16 %v50
    %v539 = vunpack.c.l.b16 %v51
    %v540 = vunpack.c.l.b16 %v52
    %v541 = vunpack.c.l.b16 %v53
    %v542 = vunpack.c.l.b16 %v54
    %v543 = vunpack.c.l.b16 %v55
    %v544 = vunpack.c.l.b16 %v56
    %v545 = vunpack.c.l.b16 %v57
    %v546 = vunpack.c.l.b16 %v58
    %v547 = vunpack.c.l.b16 %v59
    %v548 = vunpack.c.l.b16 %v60
    %v549 = vunpack.c.l.b16 %v61
    %v550 = vunpack.c.l.b16 %v62
    %v551 = vunpack.c.l.b16 %v63
    %v552 = vunpack.c.l.b16 %v64
    %v553 = vunpack.c.l.b16 %v65
    %v554 = vunpack.c.l.b16 %v66
    %v555 = vunpack.c.l.b16 %v67
    %v556 = vunpack.c.l.b16 %v68
    %v557 = vunpack.c.l.b16 %v69
    %v558 = vunpack.c.l.b16 %v70
    %v559 = vunpack.c.l.b16 %v71
    %v560 = vunpack.c.l.b16 %v72
    %v561 = vunpack.c.l.b16 %v73
    %v562 = vunpack.c.l.b16 %v74
    %v563 = vunpack.c.l.b16 %v75
    %v564 = vunpack.c.l.b16 %v76
    %v565 = vunpack.c.l.b16 %v77
    %v566 = vunpack.c.l.b16 %v78
    %v567 = vunpack.c.l.b16 %v79
    %v568 = vunpack.c.l.b16 %v80
    %v569 = vunpack.c.l.b16 %v81
    %v570 = vunpack.c.l.b16 %v82
    %v571 = vunpack.c.l.b16 %v83
    %v572 = vunpack.c.l.b16 %v84
    %v573 = vunpack.c.l.b16 %v85
    %v574 = vunpack.c.l.b16 %v86
    %v575 = vunpack.c.l.b16 %v87
    %v576 = vunpack.c.l.b16 %v88
    %v577 = vunpack.c.l.b16 %v89
    %v578 = vunpack.c.l.b16 %v90
    %v579 = vunpack.c.l.b16 %v91
    %v580 = vunpack.c.l.b16 %v92
    %v581 = vunpack.c.l.b16 %v93
    %v582 = vunpack.c.l.b16 %v94
    %v583 = vunpack.c.l.b16 %v95
    %v584 = vunpack.c.l.b16 %v96
    %v585 = vunpack.c.l.b16 %v97
    %v586 = vunpack.c.l.b16 %v98
    %v587 = vunpack.c.l.b16 %v99
    %v588 = vunpack.c.l.b16 %v100
    %v589 = vunpack.c.l.b16 %v101
    %v590 = vunpack.c.l.b16 %v102
    %v591 = vunpack.c.l.b16 %v103
    %v592 = vunpack.c.l.b16 %v104
    %v593 = vunpack.c.l.b16 %v105
    %v594 = vunpack.c.l.b16 %v106
    %v595 = vunpack.c.l.b16 %v107
    %v596 = vunpack.c.l.b16 %v108
    %v597 = vunpack.c.l.b16 %v109
    %v598 = vunpack.c.l.b16 %v110
    %v599 = vunpack.c.l.b16 %v111
    %v600 = vunpack.c.l.b16 %v112
    %v601 = vunpack.c.l.b16 %v113
    %v602 = vunpack.c.l.b16 %v114
    %v603 = vunpack.c.l.b16 %v115
    %v604 = vunpack.c.l.b16 %v116
    %v605 = vunpack.c.l.b16 %v117
    %v606 = vunpack.c.l.b16 %v118
    %v607 = vunpack.c.l.b16 %v119
    %v608 = vunpack.c.l.b16 %v120
    %v609 = vunpack.c.l.b16 %v121
    %v610 = vunpack.c.l.b16 %v122
    %v611 = vunpack.c.l.b16 %v123
    %v612 = vunpack.c.l.b16 %v124
    %v613 = vunpack.c.l.b16 %v125
    %v614 = vunpack.c.l.b16 %v126
    %v615 = vunpack.c.l.b16 %v127
    %v616 = vunpack.c.l.b16 %v128
    %v617 = vunpack.c.l.b16 %v129
    %v618 = vunpack.c.l.b16 %v130
    %v619 = vunpack.c.l.b16 %v131
    %v620 = vunpack.c.l.b16 %v132
    %v621 = vunpack.c.l.b16 %v133
    %v622 = vunpack.c.l.b16 %v134
    %v623 = vunpack.c.l.b16 %v135
    %v624 = vunpack.c.l.b16 %v136
    %v625 = vunpack.c.l.b16 %v137
    %v626 = vunpack.c.l.b16 %v138
    %v627 = vunpack.c.l.b16 %v139
    %v628 = vunpack.c.l.b16 %v140
    %v629 = vunpack.c.l.b16 %v141
    %v630 = vunpack.c.l.b16 %v142
    %v631 = vunpack.c.l.b16 %v143
    %v632 = vunpack.c.l.b16 %v144
    %v633 = vunpack.c.l.b16 %v145
    %v634 = vunpack.c.l.b16 %v146
    %v635 = vunpack.c.l.b16 %v147
    %v636 = vunpack.c.l.b16 %v148
    %v637 = vunpack.c.l.b16 %v149
    %v638 = vunpack.c.l.b16 %v150
    %v639 = vunpack.c.l.b16 %v151
    %v640 = vunpack.c.l.b16 %v152
    %v641 = vunpack.c.l.b16 %v153
    %v642 = vunpack.c.l.b16 %v154
    %v643 = vunpack.c.l.b16 %v155
    %v644 = vunpack.c.l.b16 %v156
    %v645 = vunpack.c.l.b16 %v157
    %v646 = vunpack.c.l.b16 %v158
    %v647 = vunpack.c.l.b16 %v159
    %v648 = vunpack.c.l.b16 %v160
    %v649 = vunpack.c.l.b16 %v161
    %v650 = vunpack.c.l.b16 %v162
    %v651 = vunpack.c.l.b16 %v163
    %v652 = vunpack.c.l.b16 %v164
    %v653 = vunpack.c.l.b16 %v165
    %v654 = vunpack.c.l.b16 %v166
    %v655 = vunpack.c.l.b16 %v167
    %v656 = vunpack.c.l.b16 %v168
    %v657 = vunpack.c.l.b16 %v169
    %v658 = vunpack.c.l.b16 %v170
    %v659 = vunpack.c.l.b16 %v171
    %v660 = vunpack.c.l.b16 %v172
    %v661 = vunpack.c.l.b16 %v173
    %v662 = vunpack.c.l.b16 %v174
    %v663 = vunpack.c.l.b16 %v175
    %v664 = vunpack.c.l.b16 %v176
    %v665 = vunpack.c.l.b16 %v177
    %v666 = vunpack.c.l.b16 %v178
    %v667 = vunpack.c.l.b16 %v179
    %v668 = vunpack.c.l.b16 %v180
    %v669 = vunpack.c.l.b16 %v181
    %v670 = vunpack.c.l.b16 %v182
    %v671 = vunpack.c.l.b16 %v183
    %v672 = vunpack.c.l.b16 %v184
    %v673 = vunpack.c.l.b16 %v185
    %v674 = vunpack.c.l.b16 %v186
    %v675 = vunpack.c.l.b16 %v187
    %v676 = vunpack.c.l.b16 %v188
    %v677 = vunpack.c.l.b16 %v189
    %v678 = vunpack.c.l.b16 %v190
    %v679 = vunpack.c.l.b16 %v191
    %v680 = vunpack.c.l.b16 %v192
    %v681 = vunpack.c.l.b16 %v193
    %v682 = vunpack.c.l.b16 %v194
    %v683 = vunpack.c.l.b16 %v195
    %v684 = vunpack.c.l.b16 %v196
    %v685 = vunpack.c.l.b16 %v197
    %v686 = vunpack.c.l.b16 %v198
    %v687 = vunpack.c.l.b16 %v199
    %v688 = vunpack.c.l.b16 %v200
    %v689 = vunpack.c.l.b16 %v201
    %v690 = vunpack.c.l.b16 %v202
    %v691 = vunpack.c.l.b16 %v203
    %v692 = vunpack.c.l.b16 %v204
    %v693 = vunpack.c.l.b16 %v205
    %v694 = vunpack.c.l.b16 %v206
    %v695 = vunpack.c.l.b16 %v207
    %v696 = vunpack.c.l.b16 %v208
    %v697 = vunpack.c.l.b16 %v209
    %v698 = vunpack.c.l.b16 %v210
    %v699 = vunpack.c.l.b16 %v211
    %v700 = vunpack.c.l.b16 %v212
    %v701 = vunpack.c.l.b16 %v213
    %v702 = vunpack.c.l.b16 %v214
    %v703 = vunpack.c.l.b16 %v215
    %v704 = vunpack.c.l.b16 %v216
    %v705 = vunpack.c.l.b16 %v217
    %v706 = vunpack.c.l.b16 %v218
    %v707 = vunpack.c.l.b16 %v219
    %v708 = vunpack.c.l.b16 %v220
    %v709 = vunpack.c.l.b16 %v221
    %v710 = vunpack.c.l.b16 %v222
    %v711 = vunpack.c.l.b16 %v223
    %v712 = vunpack.c.l.b16 %v224
    %v713 = vunpack.c.l.b16 %v225
    %v714 = vunpack.c.l.b16 %v226
    %v715 = vunpack.c.l.b16 %v227
    %v716 = vunpack.c.l.b16 %v228
    %v717 = vunpack.c.l.b16 %v229
    %v718 = vunpack.c.l.b16 %v230
    %v719 = vunpack.c.l.b16 %v231
    %v720 = vunpack.c.l.b16 %v232
    %v721 = vunpack.c.l.b16 %v233
    %v722 = vunpack.c.l.b16 %v234
    %v723 = vunpack.c.l.b16 %v235
    %v724 = vunpack.c.l.b16 %v236
    %v725 = vunpack.c.l.b16 %v237
    %v726 = vunpack.c.l.b16 %v238
    %v727 = vunpack.c.l.b16 %v239
    %v728 = vunpack.c.l.b16 %v240
    %v729 = vpack.c.b16 %v514, %v513
    %v730 = vpack.c.b16 %v516, %v515
    %v731 = vpack.c.b16 %v518, %v517
    %v732 = vpack.c.b16 %v520, %v519
    %v733 = vpack.c.b16 %v522, %v521
    %v734 = vpack.c.b16 %v524, %v523
    %v735 = vpack.c.b16 %v526, %v525
    %v736 = vpack.c.b16 %v528, %v527
    %v737 = vpack.c.b16 %v530, %v529
    %v738 = vpack.c.b16 %v532, %v531
    %v739 = vpack.c.b16 %v534, %v533
    %v740 = vpack.c.b16 %v536, %v535
    %v741 = vpack.c.b16 %v538, %v537
    %v742 = vpack.c.b16 %v540, %v539
    %v743 = vpack.c.b16 %v542, %v541
    %v744 = vpack.c.b16 %v544, %v543
    %v745 = vpack.c.b16 %v546, %v545
    %v746 = vpack.c.b16 %v548, %v547
    %v747 = vpack.c.b16 %v550, %v549
    %v748 = vpack.c.b16 %v552, %v551
    %v749 = vpack.c.b16 %v554, %v553
    %v750 = vpack.c.b16 %v556, %v555
    %v751 = vpack.c.b16 %v558, %v557
    %v752 = vpack.c.b16 %v560, %v559
    %v753 = vpack.c.b16 %v562, %v561
    %v754 = vpack.c.b16 %v564, %v563
    %v755 = vpack.c.b16 %v566, %v565
    %v756 = vpack.c.b16 %v568, %v567
    %v757 = vpack.c.b16 %v570, %v569
    %v758 = vpack.c.b16 %v572, %v571
    %v759 = vpack.c.b16 %v574, %v573
    %v760 = vpack.c.b16 %v576, %v575
    %v761 = vpack.c.b16 %v578, %v577
    %v762 = vpack.c.b16 %v580, %v579
    %v763 = vpack.c.b16 %v582, %v581
    %v764 = vpack.c.b16 %v584, %v583
    %v765 = vpack.c.b16 %v586, %v585
    %v766 = vpack.c.b16 %v588, %v587
    %v767 = vpack.c.b16 %v590, %v589
    %v768 = vpack.c.b16 %v592, %v591
    %v769 = vpack.c.b16 %v594, %v593
    %v770 = vpack.c.b16 %v596, %v595
    %v771 = vpack.c.b16 %v598, %v597
    %v772 = vpack.c.b16 %v600, %v599
    %v773 = vpack.c.b16 %v602, %v601
    %v774 = vpack.c.b16 %v604, %v603
    %v775 = vpack.c.b16 %v606, %v605
    %v776 = vpack.c.b16 %v608, %v607
    %v777 = vpack.c.b16 %v610, %v609
    %v778 = vpack.c.b16 %v612, %v611
    %v779 = vpack.c.b16 %v614, %v613
    %v780 = vpack.c.b16 %v616, %v615
    %v781 = vpack.c.b16 %v618, %v617
    %v782 = vpack.c.b16 %v620, %v619
    %v783 = vpack.c.b16 %v622, %v621
    %v784 = vpack.c.b16 %v624, %v623
    %v785 = vpack.c.b16 %v626, %v625
    %v786 = vpack.c.b16 %v628, %v627
    %v787 = vpack.c.b16 %v630, %v629
    %v788 = vpack.c.b16 %v632, %v631
    %v789 = vpack.c.b16 %v634, %v633
    %v790 = vpack.c.b16 %v636, %v635
    %v791 = vpack.c.b16 %v638, %v637
    %v792 = vpack.c.b16 %v640, %v639
    %v793 = vpack.c.b16 %v642, %v641
    %v794 = vpack.c.b16 %v644, %v643
    %v795 = vpack.c.b16 %v646, %v645
    %v796 = vpack.c.b16 %v648, %v647
    %v797 = vpack.c.b16 %v650, %v649
    %v798 = vpack.c.b16 %v652, %v651
    %v799 = vpack.c.b16 %v654, %v653
    %v800 = vpack.c.b16 %v656, %v655
    %v801 = vpack.c.b16 %v658, %v657
    %v802 = vpack.c.b16 %v660, %v659
    %v803 = vpack.c.b16 %v662, %v661
    %v804 = vpack.c.b16 %v664, %v663
    %v805 = vpack.c.b16 %v666, %v665
    %v806 = vpack.c.b16 %v668, %v667
    %v807 = vpack.c.b16 %v670, %v669
    %v808 = vpack.c.b16 %v672, %v671
    %v809 = vpack.c.b16 %v674, %v673
    %v810 = vpack.c.b16 %v676, %v675
    %v811 = vpack.c.b16 %v678, %v677
    %v812 = vpack.c.b16 %v680, %v679
    %v813 = vpack.c.b16 %v682, %v681
    %v814 = vpack.c.b16 %v684, %v683
    %v815 = vpack.c.b16 %v686, %v685
    %v816 = vpack.c.b16 %v688, %v687
    %v817 = vpack.c.b16 %v690, %v689
    %v818 = vpack.c.b16 %v692, %v691
    %v819 = vpack.c.b16 %v694, %v693
    %v820 = vpack.c.b16 %v696, %v695
    %v821 = vpack.c.b16 %v698, %v697
    %v822 = vpack.c.b16 %v700, %v699
    %v823 = vpack.c.b16 %v702, %v701
    %v824 = vpack.c.b16 %v704, %v703
    %v825 = vpack.c.b16 %v706, %v705
    %v826 = vpack.c.b16 %v708, %v707
    %v827 = vpack.c.b16 %v710, %v709
    %v828 = vpack.c.b16 %v712, %v711
    %v829 = vpack.c.b16 %v714, %v713
    %v830 = vpack.c.b16 %v716, %v715
    %v831 = vpack.c.b16 %v718, %v717
    %v832 = vpack.c.b16 %v720, %v719
    %v833 = vpack.c.b16 %v722, %v721
    %v834 = vpack.c.b16 %v724, %v723
    %v835 = vpack.c.b16 %v726, %v725
    %v836 = vpack.c.b16 %v728, %v727
    %vm945 = vcmask 523264
    %v947 = vsel %vm945, %v283, 0
    %949 = vmatprep.subr.bf16.mxu0 0
    %950 = vmatpush1.bf16.msra.mxu0 %v736
    %951 = vmatprep.subr.bf16.mxu0 0
    %952 = vmatpush1.bf16.msra.mxu0 %v735
    %953 = vmatprep.subr.bf16.mxu0 0
    %954 = vmatpush1.bf16.msra.mxu0 %v734
    %955 = vmatprep.subr.bf16.mxu0 0
    %956 = vmatpush1.bf16.msra.mxu0 %v733
    %957 = vmatprep.subr.bf16.mxu0 0
    %958 = vmatpush1.bf16.msra.mxu0 %v732
    %959 = vmatprep.subr.bf16.mxu0 0
    %960 = vmatpush1.bf16.msra.mxu0 %v731
    %961 = vmatprep.subr.bf16.mxu0 0
    %962 = vmatpush1.bf16.msra.mxu0 %v730
    %963 = vmatprep.subr.bf16.mxu0 0
    %964 = vmatpush1.bf16.msra.mxu0 %v729
    %965 = vmatprep.subr.bf16.mxu0 0
    %966 = vmatpush2.bf16.msra.mxu0 %v744
    %967 = vmatprep.subr.bf16.mxu0 0
    %968 = vmatpush2.bf16.msra.mxu0 %v743
    %969 = vmatprep.subr.bf16.mxu0 0
    %970 = vmatpush2.bf16.msra.mxu0 %v742
    %971 = vmatprep.subr.bf16.mxu0 0
    %972 = vmatpush2.bf16.msra.mxu0 %v741
    %973 = vmatprep.subr.bf16.mxu0 0
    %974 = vmatpush2.bf16.msra.mxu0 %v740
    %975 = vmatprep.subr.bf16.mxu0 0
    %976 = vmatpush2.bf16.msra.mxu0 %v739
    %977 = vmatprep.subr.bf16.mxu0 0
    %978 = vmatpush2.bf16.msra.mxu0 %v738
    %979 = vmatprep.subr.bf16.mxu0 0
    %980 = vmatpush2.bf16.msra.mxu0 %v737
    %981 = vmatprep.mubr.bf16.mxu0 %v271
    %982 = vmatmul.mubr.bf16.gmra.mxu0 %v270
    %v983 = vpop.f32.mrf.mxu0
    %v984 = vadd.f32 0.0, %v983
    %v985 = vpop.f32.mrf.mxu0
    %v986 = vpop.f32.mrf.mxu0
    %v987 = vpop.f32.mrf.mxu0
    %988 = vdwg.mxu0
    %989 = vmatprep.subr.bf16.mxu0 0
    %990 = vmatpush1.bf16.msra.mxu0 %v752
    %991 = vmatprep.subr.bf16.mxu0 0
    %992 = vmatpush1.bf16.msra.mxu0 %v751
    %993 = vmatprep.subr.bf16.mxu0 0
    %994 = vmatpush1.bf16.msra.mxu0 %v750
    %995 = vmatprep.subr.bf16.mxu0 0
    %996 = vmatpush1.bf16.msra.mxu0 %v749
    %997 = vmatprep.subr.bf16.mxu0 0
    %998 = vmatpush1.bf16.msra.mxu0 %v748
    %999 = vmatprep.subr.bf16.mxu0 0
    %1000 = vmatpush1.bf16.msra.mxu0 %v747
    %1001 = vmatprep.subr.bf16.mxu0 0
    %1002 = vmatpush1.bf16.msra.mxu0 %v746
    %1003 = vmatprep.subr.bf16.mxu0 0
    %1004 = vmatpush1.bf16.msra.mxu0 %v745
    %1005 = vmatprep.subr.bf16.mxu0 0
    %1006 = vmatpush2.bf16.msra.mxu0 %v760
    %1007 = vmatprep.subr.bf16.mxu0 0
    %1008 = vmatpush2.bf16.msra.mxu0 %v759
    %1009 = vmatprep.subr.bf16.mxu0 0
    %1010 = vmatpush2.bf16.msra.mxu0 %v758
    %1011 = vmatprep.subr.bf16.mxu0 0
    %1012 = vmatpush2.bf16.msra.mxu0 %v757
    %1013 = vmatprep.subr.bf16.mxu0 0
    %1014 = vmatpush2.bf16.msra.mxu0 %v756
    %1015 = vmatprep.subr.bf16.mxu0 0
    %1016 = vmatpush2.bf16.msra.mxu0 %v755
    %1017 = vmatprep.subr.bf16.mxu0 0
    %1018 = vmatpush2.bf16.msra.mxu0 %v754
    %1019 = vmatprep.subr.bf16.mxu0 0
    %1020 = vmatpush2.bf16.msra.mxu0 %v753
    %1021 = vmatprep.mubr.bf16.mxu0 %v273
    %1022 = vmatmul.mubr.bf16.gmra.mxu0 %v272
    %v1023 = vpop.f32.mrf.mxu0
    %v1024 = vadd.f32 %v984, %v1023
    %v1025 = vpop.f32.mrf.mxu0
    %v1026 = vpop.f32.mrf.mxu0
    %v1027 = vpop.f32.mrf.mxu0
    %1028 = vdwg.mxu0
    %1029 = vmatprep.subr.bf16.mxu0 0
    %1030 = vmatpush1.bf16.msra.mxu0 %v768
    %1031 = vmatprep.subr.bf16.mxu0 0
    %1032 = vmatpush1.bf16.msra.mxu0 %v767
    %1033 = vmatprep.subr.bf16.mxu0 0
    %1034 = vmatpush1.bf16.msra.mxu0 %v766
    %1035 = vmatprep.subr.bf16.mxu0 0
    %1036 = vmatpush1.bf16.msra.mxu0 %v765
    %1037 = vmatprep.subr.bf16.mxu0 0
    %1038 = vmatpush1.bf16.msra.mxu0 %v764
    %1039 = vmatprep.subr.bf16.mxu0 0
    %1040 = vmatpush1.bf16.msra.mxu0 %v763
    %1041 = vmatprep.subr.bf16.mxu0 0
    %1042 = vmatpush1.bf16.msra.mxu0 %v762
    %1043 = vmatprep.subr.bf16.mxu0 0
    %1044 = vmatpush1.bf16.msra.mxu0 %v761
    %1045 = vmatprep.subr.bf16.mxu0 0
    %1046 = vmatpush2.bf16.msra.mxu0 %v776
    %1047 = vmatprep.subr.bf16.mxu0 0
    %1048 = vmatpush2.bf16.msra.mxu0 %v775
    %1049 = vmatprep.subr.bf16.mxu0 0
    %1050 = vmatpush2.bf16.msra.mxu0 %v774
    %1051 = vmatprep.subr.bf16.mxu0 0
    %1052 = vmatpush2.bf16.msra.mxu0 %v773
    %1053 = vmatprep.subr.bf16.mxu0 0
    %1054 = vmatpush2.bf16.msra.mxu0 %v772
    %1055 = vmatprep.subr.bf16.mxu0 0
    %1056 = vmatpush2.bf16.msra.mxu0 %v771
    %1057 = vmatprep.subr.bf16.mxu0 0
    %1058 = vmatpush2.bf16.msra.mxu0 %v770
    %1059 = vmatprep.subr.bf16.mxu0 0
    %1060 = vmatpush2.bf16.msra.mxu0 %v769
    %1061 = vmatprep.mubr.bf16.mxu0 %v275
    %1062 = vmatmul.mubr.bf16.gmra.mxu0 %v274
    %v1063 = vpop.f32.mrf.mxu0
    %v1064 = vadd.f32 %v1024, %v1063
    %v1065 = vpop.f32.mrf.mxu0
    %v1066 = vpop.f32.mrf.mxu0
    %v1067 = vpop.f32.mrf.mxu0
    %1068 = vdwg.mxu0
    %1069 = vmatprep.subr.bf16.mxu0 0
    %1070 = vmatpush1.bf16.msra.mxu0 %v784
    %1071 = vmatprep.subr.bf16.mxu0 0
    %1072 = vmatpush1.bf16.msra.mxu0 %v783
    %1073 = vmatprep.subr.bf16.mxu0 0
    %1074 = vmatpush1.bf16.msra.mxu0 %v782
    %1075 = vmatprep.subr.bf16.mxu0 0
    %1076 = vmatpush1.bf16.msra.mxu0 %v781
    %1077 = vmatprep.subr.bf16.mxu0 0
    %1078 = vmatpush1.bf16.msra.mxu0 %v780
    %1079 = vmatprep.subr.bf16.mxu0 0
    %1080 = vmatpush1.bf16.msra.mxu0 %v779
    %1081 = vmatprep.subr.bf16.mxu0 0
    %1082 = vmatpush1.bf16.msra.mxu0 %v778
    %1083 = vmatprep.subr.bf16.mxu0 0
    %1084 = vmatpush1.bf16.msra.mxu0 %v777
    %1085 = vmatprep.subr.bf16.mxu0 0
    %1086 = vmatpush2.bf16.msra.mxu0 %v792
    %1087 = vmatprep.subr.bf16.mxu0 0
    %1088 = vmatpush2.bf16.msra.mxu0 %v791
    %1089 = vmatprep.subr.bf16.mxu0 0
    %1090 = vmatpush2.bf16.msra.mxu0 %v790
    %1091 = vmatprep.subr.bf16.mxu0 0
    %1092 = vmatpush2.bf16.msra.mxu0 %v789
    %1093 = vmatprep.subr.bf16.mxu0 0
    %1094 = vmatpush2.bf16.msra.mxu0 %v788
    %1095 = vmatprep.subr.bf16.mxu0 0
    %1096 = vmatpush2.bf16.msra.mxu0 %v787
    %1097 = vmatprep.subr.bf16.mxu0 0
    %1098 = vmatpush2.bf16.msra.mxu0 %v786
    %1099 = vmatprep.subr.bf16.mxu0 0
    %1100 = vmatpush2.bf16.msra.mxu0 %v785
    %1101 = vmatprep.mubr.bf16.mxu0 %v277
    %1102 = vmatmul.mubr.bf16.gmra.mxu0 %v276
    %v1103 = vpop.f32.mrf.mxu0
    %v1104 = vadd.f32 %v1064, %v1103
    %v1105 = vpop.f32.mrf.mxu0
    %v1106 = vpop.f32.mrf.mxu0
    %v1107 = vpop.f32.mrf.mxu0
    %1108 = vdwg.mxu0
    %1109 = vmatprep.subr.bf16.mxu0 0
    %1110 = vmatpush1.bf16.msra.mxu0 %v800
    %1111 = vmatprep.subr.bf16.mxu0 0
    %1112 = vmatpush1.bf16.msra.mxu0 %v799
    %1113 = vmatprep.subr.bf16.mxu0 0
    %1114 = vmatpush1.bf16.msra.mxu0 %v798
    %1115 = vmatprep.subr.bf16.mxu0 0
    %1116 = vmatpush1.bf16.msra.mxu0 %v797
    %1117 = vmatprep.subr.bf16.mxu0 0
    %1118 = vmatpush1.bf16.msra.mxu0 %v796
    %1119 = vmatprep.subr.bf16.mxu0 0
    %1120 = vmatpush1.bf16.msra.mxu0 %v795
    %1121 = vmatprep.subr.bf16.mxu0 0
    %1122 = vmatpush1.bf16.msra.mxu0 %v794
    %1123 = vmatprep.subr.bf16.mxu0 0
    %1124 = vmatpush1.bf16.msra.mxu0 %v793
    %1125 = vmatprep.subr.bf16.mxu0 0
    %1126 = vmatpush2.bf16.msra.mxu0 %v808
    %1127 = vmatprep.subr.bf16.mxu0 0
    %1128 = vmatpush2.bf16.msra.mxu0 %v807
    %1129 = vmatprep.subr.bf16.mxu0 0
    %1130 = vmatpush2.bf16.msra.mxu0 %v806
    %1131 = vmatprep.subr.bf16.mxu0 0
    %1132 = vmatpush2.bf16.msra.mxu0 %v805
    %1133 = vmatprep.subr.bf16.mxu0 0
    %1134 = vmatpush2.bf16.msra.mxu0 %v804
    %1135 = vmatprep.subr.bf16.mxu0 0
    %1136 = vmatpush2.bf16.msra.mxu0 %v803
    %1137 = vmatprep.subr.bf16.mxu0 0
    %1138 = vmatpush2.bf16.msra.mxu0 %v802
    %1139 = vmatprep.subr.bf16.mxu0 0
    %1140 = vmatpush2.bf16.msra.mxu0 %v801
    %1141 = vmatprep.mubr.bf16.mxu0 %v279
    %1142 = vmatmul.mubr.bf16.gmra.mxu0 %v278
    %v1143 = vpop.f32.mrf.mxu0
    %v1144 = vadd.f32 %v1104, %v1143
    %v1145 = vpop.f32.mrf.mxu0
    %v1146 = vpop.f32.mrf.mxu0
    %v1147 = vpop.f32.mrf.mxu0
    %1148 = vdwg.mxu0
    %1149 = vmatprep.subr.bf16.mxu0 0
    %1150 = vmatpush1.bf16.msra.mxu0 %v816
    %1151 = vmatprep.subr.bf16.mxu0 0
    %1152 = vmatpush1.bf16.msra.mxu0 %v815
    %1153 = vmatprep.subr.bf16.mxu0 0
    %1154 = vmatpush1.bf16.msra.mxu0 %v814
    %1155 = vmatprep.subr.bf16.mxu0 0
    %1156 = vmatpush1.bf16.msra.mxu0 %v813
    %1157 = vmatprep.subr.bf16.mxu0 0
    %1158 = vmatpush1.bf16.msra.mxu0 %v812
    %1159 = vmatprep.subr.bf16.mxu0 0
    %1160 = vmatpush1.bf16.msra.mxu0 %v811
    %1161 = vmatprep.subr.bf16.mxu0 0
    %1162 = vmatpush1.bf16.msra.mxu0 %v810
    %1163 = vmatprep.subr.bf16.mxu0 0
    %1164 = vmatpush1.bf16.msra.mxu0 %v809
    %1165 = vmatprep.subr.bf16.mxu0 0
    %1166 = vmatpush2.bf16.msra.mxu0 %v824
    %1167 = vmatprep.subr.bf16.mxu0 0
    %1168 = vmatpush2.bf16.msra.mxu0 %v823
    %1169 = vmatprep.subr.bf16.mxu0 0
    %1170 = vmatpush2.bf16.msra.mxu0 %v822
    %1171 = vmatprep.subr.bf16.mxu0 0
    %1172 = vmatpush2.bf16.msra.mxu0 %v821
    %1173 = vmatprep.subr.bf16.mxu0 0
    %1174 = vmatpush2.bf16.msra.mxu0 %v820
    %1175 = vmatprep.subr.bf16.mxu0 0
    %1176 = vmatpush2.bf16.msra.mxu0 %v819
    %1177 = vmatprep.subr.bf16.mxu0 0
    %1178 = vmatpush2.bf16.msra.mxu0 %v818
    %1179 = vmatprep.subr.bf16.mxu0 0
    %1180 = vmatpush2.bf16.msra.mxu0 %v817
    %1181 = vmatprep.mubr.bf16.mxu0 %v281
    %1182 = vmatmul.mubr.bf16.gmra.mxu0 %v280
    %v1183 = vpop.f32.mrf.mxu0
    %v1184 = vadd.f32 %v1144, %v1183
    %v1185 = vpop.f32.mrf.mxu0
    %v1186 = vpop.f32.mrf.mxu0
    %v1187 = vpop.f32.mrf.mxu0
    %1188 = vdwg.mxu0
    %1189 = vmatprep.subr.bf16.mxu0 0
    %1190 = vmatpush1.bf16.msra.mxu0 %v832
    %1191 = vmatprep.subr.bf16.mxu0 0
    %1192 = vmatpush1.bf16.msra.mxu0 %v831
    %1193 = vmatprep.subr.bf16.mxu0 0
    %1194 = vmatpush1.bf16.msra.mxu0 %v830
    %1195 = vmatprep.subr.bf16.mxu0 0
    %1196 = vmatpush1.bf16.msra.mxu0 %v829
    %1197 = vmatprep.subr.bf16.mxu0 0
    %1198 = vmatpush1.bf16.msra.mxu0 %v828
    %1199 = vmatprep.subr.bf16.mxu0 0
    %1200 = vmatpush1.bf16.msra.mxu0 %v827
    %1201 = vmatprep.subr.bf16.mxu0 0
    %1202 = vmatpush1.bf16.msra.mxu0 %v826
    %1203 = vmatprep.subr.bf16.mxu0 0
    %1204 = vmatpush1.bf16.msra.mxu0 %v825
    %1205 = vmatprep.subr.bf16.mxu0 0
    %1206 = vmatpush2.bf16.msra.mxu0 0
    %1207 = vmatprep.subr.bf16.mxu0 0
    %1208 = vmatpush2.bf16.msra.mxu0 0
    %1209 = vmatprep.subr.bf16.mxu0 0
    %1210 = vmatpush2.bf16.msra.mxu0 0
    %1211 = vmatprep.subr.bf16.mxu0 0
    %1212 = vmatpush2.bf16.msra.mxu0 0
    %1213 = vmatprep.subr.bf16.mxu0 0
    %1214 = vmatpush2.bf16.msra.mxu0 %v836
    %1215 = vmatprep.subr.bf16.mxu0 0
    %1216 = vmatpush2.bf16.msra.mxu0 %v835
    %1217 = vmatprep.subr.bf16.mxu0 0
    %1218 = vmatpush2.bf16.msra.mxu0 %v834
    %1219 = vmatprep.subr.bf16.mxu0 0
    %1220 = vmatpush2.bf16.msra.mxu0 %v833
    %1221 = vmatprep.mubr.bf16.mxu0 %v947
    %1222 = vmatmul.mubr.bf16.gmra.mxu0 %v282
    %v1223 = vpop.f32.mrf.mxu0
    %v1224 = vadd.f32 %v1184, %v1223
    %v1225 = vpop.f32.mrf.mxu0
    %v1226 = vpop.f32.mrf.mxu0
    %v1227 = vpop.f32.mrf.mxu0
    %1228 = vdwg.mxu0
    %v1229 = vadd.f32 %v241, %v1224
    %vm1230 = vcmask 367616
    %1231 = vst.msk [vmem:[#allocation2] sm:$0xff] %vm1230, %v1229
    // Predicated region
    $region22: #{tpu_custom_call.1} parent=1 // pred_check
      %p1232 = pneg %p19
    $region23: #{tpu_custom_call.1} parent=1 // pred_check_branch
      %1234 = sbr.rel (%p1232) target = $region25
    $region24: #{tpu_custom_call.1} parent=1 // pred_region
      %v1235 = vld [vmem:[#allocation2] sm:$0xff]
      %v1236 = vld [vmem:[%s2] sm:$0x1]
      %v1238 = vlaneseq
      %v1239 = vshrl.u32 %v1238, 7
      %v1240 = vsub.s32 0, %v1239
      %v1241 = vrot.slane %v1236, %v1240
      %v1243 = vmul.f32 %v1235, %v1241
      %v1244 = vld [vmem:[%s3] sm:$0x1]
      %v1246 = vlaneseq
      %v1247 = vshrl.u32 %v1246, 7
      %v1248 = vsub.s32 0, %v1247
      %v1249 = vrot.slane %v1244, %v1248
      %v1251 = vadd.f32 %v1243, %v1249
      %vm1252 = vcmp.ge.f32.partialorder %v1251, 0.0
      %v1253 = vmul.f32 %v1251, 0.01
      %v1254 = vsel %vm1252, %v1251, %v1253
      %v1255 = vpack.c.bf16 %v1254, %v1254
      %vm1256 = vcmask 363520
      %1257 = vst.msk [vmem:[#allocation3] sm:$0xf] %vm1256, %v1255
    $region25: #{tpu_custom_call.1} parent=1 // pred_fallthru
      _
    // Predicated region
    $region26: #{tpu_custom_call.1} parent=1 // pred_check
      _
    $region27: #{tpu_custom_call.1} parent=1 // pred_check_branch
      %1259 = sbr.rel (0) target = $region29
    $region28: #{tpu_custom_call.1} parent=1 // pred_region
      %s1261 = ssub.s32 64, 64
      %1262 = vsyncadd [#allocation4], %s1261
      %s1264 = sshll.u32 [#allocation3], 4
      %s1265 = int_to_ptr.vmem [resolvable:$true] %s1264
      %1267 = dma.vmem_to_hbm [thread:$0]  %s1265, 64, %s4, [#allocation4]
    $region29: #{tpu_custom_call.1} parent=1 // pred_fallthru
      _
    // Predicated region
    $region30: #{tpu_custom_call.1} parent=1 // pred_check
      _
    $region31: #{tpu_custom_call.1} parent=1 // pred_check_branch
      %1269 = sbr.rel (0) target = $region33
    $region32: #{tpu_custom_call.1} parent=1 // pred_region
      %1270 = dma.done [#allocation4], 64
    $region33: #{tpu_custom_call.1} parent=1 // pred_fallthru
      _
    %1271 = vsyncpa [#allocation4], 1

</llo_original>
